<compile_context>
chip_gen: v6e
topology: v6e:2x2x1
jax: 0.10.0
libtpu: 0.0.40
codegen_flags: <defaults>
</compile_context>

<pallas_src>
import functools
import math

import numpy as np
import jax
import jax.numpy as jnp
from jax.experimental import pallas as pl
from jax.experimental.pallas import tpu as pltpu


def _time_embedding_kernel(t_ref, fp_ref, o_ref, *, k):
    """One grid step: emit a lane-dense (tile_g, k*dim) block of embeddings.

    t_ref:  (tile_g, k)   f32 timesteps (k timesteps packed per output row)
    fp_ref: (2, dim)      f32; row 0 = [inv_freq, inv_freq], row 1 = [0.., pi/2..]
    o_ref:  (tile_g, k*dim) f32
    """
    t = t_ref[...]
    freq = fp_ref[0:1, :]     # (1, dim)
    phase = fp_ref[1:2, :]    # (1, dim)
    # cos(x) = sin(x + pi/2): exactly one transcendental per output element.
    parts = [jnp.sin(t[:, j:j + 1] * freq + phase) for j in range(k)]
    emb = parts[0] if k == 1 else jnp.concatenate(parts, axis=-1)
    o_ref[...] = emb.astype(o_ref.dtype)


def time_embedding_pallas(timesteps: jax.Array, dim: int,
                          *, vmem_budget_bytes: int = 16 * 1024 * 1024) -> jax.Array:
    """Sinusoidal time embedding of an arbitrary-shaped timestep tensor."""
    assert dim % 2 == 0 and dim >= 4, "TimeEmbedding requires an even dim >= 4"
    half_dim = dim // 2

    # Host-side (numpy) constant folding of frequency + phase rows: identical
    # inv_freq to the PyTorch buffer, duplicated; phase selects sin vs cos.
    inv_freq = np.exp(
        np.arange(half_dim, dtype=np.float32)
        * np.float32(-math.log(10000.0) / (half_dim - 1))
    ).astype(np.float32)
    freq_row = np.concatenate([inv_freq, inv_freq])
    phase_row = np.concatenate(
        [np.zeros(half_dim, np.float32), np.full(half_dim, np.pi / 2, np.float32)]
    )
    freq_phase = jnp.asarray(np.stack([freq_row, phase_row], axis=0))  # (2, dim) f32

    in_shape = timesteps.shape
    rows = int(np.prod(in_shape)) if len(in_shape) else 1
    t_flat = timesteps.reshape(-1).astype(jnp.float32)

    # Lane packing: for dim < 128 fold k timesteps per output row so the output
    # block is >= 128 lanes wide (unmasked, lane-dense HBM stores).
    k = 1
    if dim < 128 and 128 % dim == 0:
        k_full = 128 // dim
        if rows % k_full == 0:
            k = k_full
    rows_g = rows // k
    w = k * dim
    t2d = t_flat.reshape(rows_g, k)

    # Tile sizing. Budget covers the double-buffered output block plus the
    # timestep block, whose k (<=128) lanes pad to a full 128-lane tile
    # (512 B per row, double-buffered).
    per_row_bytes = 2 * w * 4 + 2 * 128 * 4
    tile_g = (vmem_budget_bytes // per_row_bytes) // 8 * 8
    tile_g = max(8, min(4096, tile_g))
    rows_g_ceil8 = pl.cdiv(rows_g, 8) * 8
    if tile_g >= rows_g_ceil8:
        if rows_g > 8:
            # Split into >= 2 "parallel" blocks so both v7x TensorCores get work.
            tile_g = max(8, pl.cdiv(pl.cdiv(rows_g, 2), 8) * 8)
        else:
            tile_g = rows_g_ceil8

    grid = (pl.cdiv(rows_g, tile_g),)

    out2d = pl.pallas_call(
        functools.partial(_time_embedding_kernel, k=k),
        out_shape=jax.ShapeDtypeStruct((rows_g, w), jnp.float32),
        grid_spec=pltpu.PrefetchScalarGridSpec(
            num_scalar_prefetch=0,
            grid=grid,
            in_specs=[
                pl.BlockSpec((tile_g, k), lambda i: (i, 0)),   # timesteps
                pl.BlockSpec((2, dim), lambda i: (0, 0)),      # freq/phase (resident)
            ],
            out_specs=pl.BlockSpec((tile_g, w), lambda i: (i, 0)),
        ),
        compiler_params=pltpu.CompilerParams(
            dimension_semantics=("parallel",),
            vmem_limit_bytes=32 * 1024 * 1024,
        ),
    )(t2d, freq_phase)

    # Contiguous (free) reshapes only — no pad, no slice, no transpose.
    return out2d.reshape(*in_shape, dim)


if __name__ == "__main__":
    key = jax.random.PRNGKey(0)
    dim = 32
    # Small diffusion-style timestep tensor; arbitrary leading shape (2, 4).
    t = jax.random.uniform(key, (2, 4), dtype=jnp.float32, minval=0.0, maxval=100.0)

    y = time_embedding_pallas(t, dim)
    jax.block_until_ready(y)

    # Pure-JAX reference matching the PyTorch module.
    half_dim = dim // 2
    inv_freq_ref = jnp.exp(
        jnp.arange(half_dim, dtype=jnp.float32) * (-math.log(10000.0) / (half_dim - 1))
    )
    sinusoid = t.reshape(-1).astype(jnp.float32)[:, None] * inv_freq_ref[None, :]
    y_ref = jnp.concatenate(
        [jnp.sin(sinusoid), jnp.cos(sinusoid)], axis=-1
    ).reshape(*t.shape, dim)

    assert y.shape == (*t.shape, dim) and y.dtype == jnp.float32
    err = float(jnp.max(jnp.abs(y - y_ref)))
    assert jnp.allclose(y, y_ref, atol=1e-4, rtol=1e-4), err

    print("KERNEL_OK")
</pallas_src>

<mosaic_0001>
module attributes {stable_mosaic.version = 11 : i64} {
  func.func @_time_embedding_kernel(%arg0: i32, %arg1: memref<8x4xf32, #tpu.memory_space<vmem>>, %arg2: memref<2x32xf32, #tpu.memory_space<vmem>>, %arg3: memref<8x128xf32, #tpu.memory_space<vmem>>) attributes {dimension_semantics = [#tpu.dimension_semantics<parallel>], iteration_bounds = array<i64: 1>, scalar_prefetch = 0 : i64, scratch_operands = 0 : i64, tpu.core_type = #tpu.core_type<tc>, window_params = [{transform_indices = @transform_0, window_bounds = array<i64: 8, 4>}, {pipeline_mode = #tpu.pipeline_mode<synchronous>, transform_indices = @transform_1, window_bounds = array<i64: 2, 32>}, {transform_indices = @transform_2, window_bounds = array<i64: 8, 128>}]} {
    %c0 = arith.constant 0 : index
    %c0_0 = arith.constant 0 : index
    %0 = vector.load %arg1[%c0, %c0_0] : memref<8x4xf32, #tpu.memory_space<vmem>>, vector<8x4xf32>
    %c0_1 = arith.constant 0 : index
    %c0_2 = arith.constant 0 : index
    %1 = vector.load %arg2[%c0_1, %c0_2] : memref<2x32xf32, #tpu.memory_space<vmem>>, vector<1x32xf32>
    %c1 = arith.constant 1 : index
    %c0_3 = arith.constant 0 : index
    %2 = vector.load %arg2[%c1, %c0_3] : memref<2x32xf32, #tpu.memory_space<vmem>>, vector<1x32xf32>
    %3 = vector.extract_strided_slice %0 {offsets = [0, 0], sizes = [8, 1], strides = [1, 1]} : vector<8x4xf32> to vector<8x1xf32>
    %4 = vector.broadcast %3 : vector<8x1xf32> to vector<8x32xf32>
    %5 = vector.broadcast %1 : vector<1x32xf32> to vector<8x32xf32>
    %6 = arith.mulf %4, %5 : vector<8x32xf32>
    %7 = vector.broadcast %2 : vector<1x32xf32> to vector<8x32xf32>
    %8 = arith.addf %6, %7 : vector<8x32xf32>
    %9 = math.sin %8 : vector<8x32xf32>
    %10 = vector.extract_strided_slice %0 {offsets = [0, 1], sizes = [8, 1], strides = [1, 1]} : vector<8x4xf32> to vector<8x1xf32>
    %11 = vector.broadcast %10 : vector<8x1xf32> to vector<8x32xf32>
    %12 = vector.broadcast %1 : vector<1x32xf32> to vector<8x32xf32>
    %13 = arith.mulf %11, %12 : vector<8x32xf32>
    %14 = vector.broadcast %2 : vector<1x32xf32> to vector<8x32xf32>
    %15 = arith.addf %13, %14 : vector<8x32xf32>
    %16 = math.sin %15 : vector<8x32xf32>
    %17 = vector.extract_strided_slice %0 {offsets = [0, 2], sizes = [8, 1], strides = [1, 1]} : vector<8x4xf32> to vector<8x1xf32>
    %18 = vector.broadcast %17 : vector<8x1xf32> to vector<8x32xf32>
    %19 = vector.broadcast %1 : vector<1x32xf32> to vector<8x32xf32>
    %20 = arith.mulf %18, %19 : vector<8x32xf32>
    %21 = vector.broadcast %2 : vector<1x32xf32> to vector<8x32xf32>
    %22 = arith.addf %20, %21 : vector<8x32xf32>
    %23 = math.sin %22 : vector<8x32xf32>
    %24 = vector.extract_strided_slice %0 {offsets = [0, 3], sizes = [8, 1], strides = [1, 1]} : vector<8x4xf32> to vector<8x1xf32>
    %25 = vector.broadcast %24 : vector<8x1xf32> to vector<8x32xf32>
    %26 = vector.broadcast %1 : vector<1x32xf32> to vector<8x32xf32>
    %27 = arith.mulf %25, %26 : vector<8x32xf32>
    %28 = vector.broadcast %2 : vector<1x32xf32> to vector<8x32xf32>
    %29 = arith.addf %27, %28 : vector<8x32xf32>
    %30 = math.sin %29 : vector<8x32xf32>
    %31 = tpu.concatenate %9, %16, %23, %30 in 1 : vector<8x32xf32>, vector<8x32xf32>, vector<8x32xf32>, vector<8x32xf32> -> vector<8x128xf32>
    %c0_4 = arith.constant 0 : index
    %c0_5 = arith.constant 0 : index
    %32 = vector.load %arg3[%c0_4, %c0_5] : memref<8x128xf32, #tpu.memory_space<vmem>>, vector<8x128xf32>
    tpu.vector_store %arg3[%c0_4, %c0_5], %31 {strides = array<i32>} : memref<8x128xf32, #tpu.memory_space<vmem>>, vector<8x128xf32>,
    return
  }
  func.func @transform_0(%arg0: i32) -> (i32, i32) {
    %c0_i32 = arith.constant 0 : i32
    %c0_i32_0 = arith.constant 0 : i32
    return %arg0, %c0_i32 : i32, i32
  }
  func.func @transform_1(%arg0: i32) -> (i32, i32) {
    %c0_i32 = arith.constant 0 : i32
    %c0_i32_0 = arith.constant 0 : i32
    %c0_i32_1 = arith.constant 0 : i32
    return %c0_i32, %c0_i32_0 : i32, i32
  }
  func.func @transform_2(%arg0: i32) -> (i32, i32) {
    %c0_i32 = arith.constant 0 : i32
    %c0_i32_0 = arith.constant 0 : i32
    return %arg0, %c0_i32 : i32, i32
  }
}

</mosaic_0001>

<llo_original>
// kernel: tpu_custom_call.1
$region0: #{tpu_custom_call.1}
  #allocation0 [shape = 'u32[]', space=smem, size = 0x4, offset = 0x4, fixed_abs, tag = 'smem constant byte address 0x4 - core index']
  #allocation1 [shape = 'u32[144,128]{1,0:T(1,128)}', space=vmem, size = 0x12000, scoped, tag = 'internal scratch']
  %s0 = inlined_call_operand.hbm [shape: f32[2,4], index: 0, kind: input, shape index: {}]
  %s1 = inlined_call_operand.hbm [shape: f32[2,32], index: 1, kind: input, shape index: {}]
  %s2 = inlined_call_operand.hbm [shape: f32[2,128], index: 2, kind: output, shape index: {}]
  %s3 = sld [smem:[#allocation0]]
  $region26: #{tpu_custom_call.1} parent=0
    _
  %s5 = ssub.s32 1, %s3
  %s6 = scalar_select 0, %s5, %s3
  $region1: #{tpu_custom_call.1} parent=0
    #allocation2 [shape = 'u8[4096]{0}', space=vmem, size = 0x1000, scoped, tag = 'input window, operand 0, single buffered']
    #allocation3 [shape = 's32[1]{0}', space=sflag, size = 0x4, scoped, tag = 'scoped memory for tpu_custom_call.1']
    #allocation4 [shape = 's32[1]{0}', space=sflag, size = 0x4, scoped, tag = 'scoped memory for tpu_custom_call.1']
    #allocation5 [shape = 'u8[1024]{0}', space=vmem, size = 0x400, scoped, tag = 'input window, operand 1, single buffered']
    #allocation6 [shape = 's32[1]{0}', space=sflag, size = 0x4, scoped, tag = 'scoped memory for tpu_custom_call.1']
    #allocation7 [shape = 'u8[4096]{0}', space=vmem, size = 0x1000, scoped, tag = 'output window, operand 0, single buffered']
    %7 = vsyncpa [#allocation3], 0
    %8 = vsyncpa [#allocation6], 0
    %9 = vsyncpa [#allocation4], 0
    // Predicated region
    $region2: #{tpu_custom_call.1} parent=1 // pred_check
      _
    $region3: #{tpu_custom_call.1} parent=1 // pred_check_branch
      %11 = sbr.rel (0) target = $region5
    $region4: #{tpu_custom_call.1} parent=1 // pred_region
      %s13 = ssub.s32 128, 32
      %14 = vsyncadd [#allocation3], %s13
      %s15 = sshll.u32 [#allocation2], 4
      %s16 = int_to_ptr.vmem [resolvable:$true] %s15
      %21 = dma.hbm_to_vmem [thread:$0]  %s0, 32, %s16, [#allocation3], 32, 32, 2
    $region5: #{tpu_custom_call.1} parent=1 // pred_fallthru
      _
    // Predicated region
    $region6: #{tpu_custom_call.1} parent=1 // pred_check
      _
    $region7: #{tpu_custom_call.1} parent=1 // pred_check_branch
      %23 = sbr.rel (0) target = $region9
    $region8: #{tpu_custom_call.1} parent=1 // pred_region
      %s25 = ssub.s32 32, 32
      %26 = vsyncadd [#allocation6], %s25
      %s28 = sshll.u32 [#allocation5], 4
      %s29 = int_to_ptr.vmem [resolvable:$true] %s28
      %31 = dma.hbm_to_vmem [thread:$0]  %s1, 32, %s29, [#allocation6]
    $region9: #{tpu_custom_call.1} parent=1 // pred_fallthru
      _
    // Predicated region
    $region10: #{tpu_custom_call.1} parent=1 // pred_check
      _
    $region11: #{tpu_custom_call.1} parent=1 // pred_check_branch
      %33 = sbr.rel (0) target = $region13
    $region12: #{tpu_custom_call.1} parent=1 // pred_region
      %34 = dma.done [#allocation3], 128
    $region13: #{tpu_custom_call.1} parent=1 // pred_fallthru
      _
    // Predicated region
    $region14: #{tpu_custom_call.1} parent=1 // pred_check
      _
    $region15: #{tpu_custom_call.1} parent=1 // pred_check_branch
      %36 = sbr.rel (0) target = $region17
    $region16: #{tpu_custom_call.1} parent=1 // pred_region
      %37 = dma.done [#allocation6], 32
    $region17: #{tpu_custom_call.1} parent=1 // pred_fallthru
      _
    %v38 = vld [vmem:[#allocation2] sm:$0xff]
    %v39 = vld [vmem:[#allocation5] sm:$0x1]
    %v40 = vld [vmem:[#allocation5 + $0x1] sm:$0x1]
    %42 = vset.pattern.permute.xlu0 0
    %43 = vperm.xlu0 %42, %v38
    %v44 = vpop.permute.xlu0 %43
    %v46 = vlaneseq
    %v47 = vshrl.u32 %v46, 7
    %v48 = vsub.s32 0, %v47
    %v49 = vrot.slane %v39, %v48
    %v50 = vmul.f32 %v44, %v49
    %v51 = vlaneseq
    %v52 = vshrl.u32 %v51, 7
    %v53 = vsub.s32 0, %v52
    %v54 = vrot.slane %v40, %v53
    %v55 = vadd.f32 %v50, %v54
    %v56 = vand.u32 2147483647, %v55
    %vm57 = vcmp.le.f32.partialorder %v56, 0.7853982
    %vm58 = vcmp.lt.s32.totalorder %v55, 0
    %v59 = vand.u32 %v55, 2139095040
    %v60 = vshrl.u32 %v59, 23
    %v61 = vsub.s32 %v60, 127
    %v62 = vand.u32 2147483647, %v55
    %v63 = vand.u32 %v62, 8388607
    %v64 = vor.u32 %v63, 8388608
    %v65 = vsub.s32 0, %v64
    %v66 = vadd.s32 %v61, 1
    %vm67 = vcmp.gt.s32.totalorder %v66, 0
    %v68 = vsel %vm67, %v66, 0
    %v69 = vshrl.u32 %v68, 5
    %v70 = vand.u32 %v68, 31
    %v71 = vsub.s32 32, %v70
    %v72 = vshrl.u32 683565275, %v71
    %v73 = vshll.u32 683565275, %v70
    %v74 = vshrl.u32 2475754826, %v71
    %v75 = vor.u32 %v73, %v74
    %v76 = vshll.u32 2475754826, %v70
    %v77 = vshrl.u32 2131351028, %v71
    %v78 = vor.u32 %v76, %v77
    %v79 = vshll.u32 2131351028, %v70
    %v80 = vshrl.u32 2102212464, %v71
    %v81 = vor.u32 %v79, %v80
    %v82 = vshll.u32 2102212464, %v70
    %v83 = vshrl.u32 920167782, %v71
    %v84 = vor.u32 %v82, %v83
    %v85 = vshll.u32 920167782, %v70
    %v86 = vshrl.u32 1326507024, %v71
    %v87 = vor.u32 %v85, %v86
    %vm88 = vcmp.lt.s32.totalorder %v69, 1
    %vm89 = vcmp.lt.s32.totalorder %v69, 2
    %vm90 = vcmp.lt.s32.totalorder %v69, 3
    %vm91 = vcmp.lt.s32.totalorder %v69, 4
    %v92 = vsel %vm88, %v72, %v75
    %v93 = vsel %vm91, %v81, 2102212464
    %v94 = vsel %vm90, %v78, %v93
    %v95 = vsel %vm89, %v92, %v94
    %v96 = vsel %vm88, %v75, %v78
    %v97 = vsel %vm91, %v84, 920167782
    %v98 = vsel %vm90, %v81, %v97
    %v99 = vsel %vm89, %v96, %v98
    %v100 = vsel %vm88, %v78, %v81
    %v101 = vsel %vm91, %v87, 1326507024
    %v102 = vsel %vm90, %v84, %v101
    %v103 = vsel %vm89, %v100, %v102
    %v104 = vshll.u32 %v64, 8
    %v105 = vmul.u32.u64.compose %v104, %v103
    %v106 = vextract.low.u32 %v105
    %v107 = vextract.high.u32 %v105
    %v108 = vmul.u32.u64.compose %v104, %v99
    %v109 = vextract.low.u32 %v108
    %v110 = vextract.high.u32 %v108
    %v111 = vmul.u32 %v104, %v95
    %v112 = vadd.s32 %v107, %v109
    %vm113 = vc.u32 %v107, %v109
    %v114 = vadd.s32 %v110, 1
    %v115 = vsel %vm113, %v114, %v110
    %v116 = vadd.s32 %v111, %v115
    %v117 = vadd.s32 %v116, 536870912
    %v118 = vshrl.u32 %v117, 30
    %v119 = vshll.u32 %v118, 30
    %v120 = vsub.s32 %v116, %v119
    %vm121 = vcmp.lt.s32.totalorder %v120, 0
    %v122 = vsub.s32 0, %v120
    %v123 = vsel %vm121, %v122, %v120
    %v124 = vclz %v123
    %v125 = vsub.s32 %v124, 2
    %vm126 = vcmp.gt.s32.totalorder 0, %v125
    %v127 = vsel %vm126, 0, %v125
    %v128 = vsub.s32 32, %v127
    %v129 = vshll.u32 %v120, %v127
    %v130 = vshrl.u32 %v112, %v128
    %v131 = vor.u32 %v129, %v130
    %v132 = vsub.s32 4294967266, %v127
    %v133 = vadd.s32 %v132, 127
    %v134 = vshll.u32 %v133, 23
    %v135 = vor.u32 4788187, %v134
    %v136 = vand.u32 2147483647, %v135
    %v138 = vcvt.s32.f32 %v131
    %v139 = vmul.f32 %v138, %v136
    %v140 = vxor.u32 %v139, 2147483648
    %v141 = vsel %vm58, %v140, %v139
    %v142 = vsub.s32 4, %v118
    %v143 = vsel %vm58, %v142, %v118
    %v144 = vsel %vm57, %v55, %v141
    %v145 = vsel %vm57, 0, %v143
    %v146 = vcosq.f32.pop %v144
    %v147 = vsinq.f32.pop %v144
    %vm148 = vweird.f32 %v55
    %v149 = vadd.s32 %v145, 3
    %v150 = vand.u32 %v149, 3
    %vm151 = vcmp.lt.s32.totalorder %v150, 2
    %vm152 = vcmp.eq.s32.totalorder %v150, 0
    %v153 = vxor.u32 %v147, 2147483648
    %v154 = vsel %vm152, %v146, %v153
    %vm155 = vcmp.eq.s32.totalorder %v150, 2
    %v156 = vxor.u32 %v146, 2147483648
    %v157 = vsel %vm155, %v156, %v147
    %v158 = vsel %vm151, %v154, %v157
    %v159 = vsel %vm148, nan, %v158
    %160 = vset.pattern.permute.xlu0 1
    %161 = vperm.xlu0 %160, %v38
    %v162 = vpop.permute.xlu0 %161
    %v164 = vmul.f32 %v162, %v49
    %v165 = vadd.f32 %v164, %v54
    %v166 = vand.u32 2147483647, %v165
    %vm167 = vcmp.le.f32.partialorder %v166, 0.7853982
    %vm168 = vcmp.lt.s32.totalorder %v165, 0
    %v169 = vand.u32 %v165, 2139095040
    %v170 = vshrl.u32 %v169, 23
    %v171 = vsub.s32 %v170, 127
    %v172 = vand.u32 2147483647, %v165
    %v173 = vand.u32 %v172, 8388607
    %v174 = vor.u32 %v173, 8388608
    %v175 = vsub.s32 0, %v174
    %v176 = vadd.s32 %v171, 1
    %vm177 = vcmp.gt.s32.totalorder %v176, 0
    %v178 = vsel %vm177, %v176, 0
    %v179 = vshrl.u32 %v178, 5
    %v180 = vand.u32 %v178, 31
    %v181 = vsub.s32 32, %v180
    %v182 = vshrl.u32 683565275, %v181
    %v183 = vshll.u32 683565275, %v180
    %v184 = vshrl.u32 2475754826, %v181
    %v185 = vor.u32 %v183, %v184
    %v186 = vshll.u32 2475754826, %v180
    %v187 = vshrl.u32 2131351028, %v181
    %v188 = vor.u32 %v186, %v187
    %v189 = vshll.u32 2131351028, %v180
    %v190 = vshrl.u32 2102212464, %v181
    %v191 = vor.u32 %v189, %v190
    %v192 = vshll.u32 2102212464, %v180
    %v193 = vshrl.u32 920167782, %v181
    %v194 = vor.u32 %v192, %v193
    %v195 = vshll.u32 920167782, %v180
    %v196 = vshrl.u32 1326507024, %v181
    %v197 = vor.u32 %v195, %v196
    %vm198 = vcmp.lt.s32.totalorder %v179, 1
    %vm199 = vcmp.lt.s32.totalorder %v179, 2
    %vm200 = vcmp.lt.s32.totalorder %v179, 3
    %vm201 = vcmp.lt.s32.totalorder %v179, 4
    %v202 = vsel %vm198, %v182, %v185
    %v203 = vsel %vm201, %v191, 2102212464
    %v204 = vsel %vm200, %v188, %v203
    %v205 = vsel %vm199, %v202, %v204
    %v206 = vsel %vm198, %v185, %v188
    %v207 = vsel %vm201, %v194, 920167782
    %v208 = vsel %vm200, %v191, %v207
    %v209 = vsel %vm199, %v206, %v208
    %v210 = vsel %vm198, %v188, %v191
    %v211 = vsel %vm201, %v197, 1326507024
    %v212 = vsel %vm200, %v194, %v211
    %v213 = vsel %vm199, %v210, %v212
    %v214 = vshll.u32 %v174, 8
    %v215 = vmul.u32.u64.compose %v214, %v213
    %v216 = vextract.low.u32 %v215
    %v217 = vextract.high.u32 %v215
    %v218 = vmul.u32.u64.compose %v214, %v209
    %v219 = vextract.low.u32 %v218
    %v220 = vextract.high.u32 %v218
    %v221 = vmul.u32 %v214, %v205
    %v222 = vadd.s32 %v217, %v219
    %vm223 = vc.u32 %v217, %v219
    %v224 = vadd.s32 %v220, 1
    %v225 = vsel %vm223, %v224, %v220
    %v226 = vadd.s32 %v221, %v225
    %v227 = vadd.s32 %v226, 536870912
    %v228 = vshrl.u32 %v227, 30
    %v229 = vshll.u32 %v228, 30
    %v230 = vsub.s32 %v226, %v229
    %vm231 = vcmp.lt.s32.totalorder %v230, 0
    %v232 = vsub.s32 0, %v230
    %v233 = vsel %vm231, %v232, %v230
    %v234 = vclz %v233
    %v235 = vsub.s32 %v234, 2
    %vm236 = vcmp.gt.s32.totalorder 0, %v235
    %v237 = vsel %vm236, 0, %v235
    %v238 = vsub.s32 32, %v237
    %v239 = vshll.u32 %v230, %v237
    %v240 = vshrl.u32 %v222, %v238
    %v241 = vor.u32 %v239, %v240
    %v242 = vsub.s32 4294967266, %v237
    %v243 = vadd.s32 %v242, 127
    %v244 = vshll.u32 %v243, 23
    %v245 = vor.u32 4788187, %v244
    %v246 = vand.u32 2147483647, %v245
    %v248 = vcvt.s32.f32 %v241
    %v249 = vmul.f32 %v248, %v246
    %v250 = vxor.u32 %v249, 2147483648
    %v251 = vsel %vm168, %v250, %v249
    %v252 = vsub.s32 4, %v228
    %v253 = vsel %vm168, %v252, %v228
    %v254 = vsel %vm167, %v165, %v251
    %v255 = vsel %vm167, 0, %v253
    %v256 = vcosq.f32.pop %v254
    %v257 = vsinq.f32.pop %v254
    %vm258 = vweird.f32 %v165
    %v259 = vadd.s32 %v255, 3
    %v260 = vand.u32 %v259, 3
    %vm261 = vcmp.lt.s32.totalorder %v260, 2
    %vm262 = vcmp.eq.s32.totalorder %v260, 0
    %v263 = vxor.u32 %v257, 2147483648
    %v264 = vsel %vm262, %v256, %v263
    %vm265 = vcmp.eq.s32.totalorder %v260, 2
    %v266 = vxor.u32 %v256, 2147483648
    %v267 = vsel %vm265, %v266, %v257
    %v268 = vsel %vm261, %v264, %v267
    %v269 = vsel %vm258, nan, %v268
    %270 = vset.pattern.permute.xlu0 2
    %271 = vperm.xlu0 %270, %v38
    %v272 = vpop.permute.xlu0 %271
    %v274 = vmul.f32 %v272, %v49
    %v275 = vadd.f32 %v274, %v54
    %v276 = vand.u32 2147483647, %v275
    %vm277 = vcmp.le.f32.partialorder %v276, 0.7853982
    %vm278 = vcmp.lt.s32.totalorder %v275, 0
    %v279 = vand.u32 %v275, 2139095040
    %v280 = vshrl.u32 %v279, 23
    %v281 = vsub.s32 %v280, 127
    %v282 = vand.u32 2147483647, %v275
    %v283 = vand.u32 %v282, 8388607
    %v284 = vor.u32 %v283, 8388608
    %v285 = vsub.s32 0, %v284
    %v286 = vadd.s32 %v281, 1
    %vm287 = vcmp.gt.s32.totalorder %v286, 0
    %v288 = vsel %vm287, %v286, 0
    %v289 = vshrl.u32 %v288, 5
    %v290 = vand.u32 %v288, 31
    %v291 = vsub.s32 32, %v290
    %v292 = vshrl.u32 683565275, %v291
    %v293 = vshll.u32 683565275, %v290
    %v294 = vshrl.u32 2475754826, %v291
    %v295 = vor.u32 %v293, %v294
    %v296 = vshll.u32 2475754826, %v290
    %v297 = vshrl.u32 2131351028, %v291
    %v298 = vor.u32 %v296, %v297
    %v299 = vshll.u32 2131351028, %v290
    %v300 = vshrl.u32 2102212464, %v291
    %v301 = vor.u32 %v299, %v300
    %v302 = vshll.u32 2102212464, %v290
    %v303 = vshrl.u32 920167782, %v291
    %v304 = vor.u32 %v302, %v303
    %v305 = vshll.u32 920167782, %v290
    %v306 = vshrl.u32 1326507024, %v291
    %v307 = vor.u32 %v305, %v306
    %vm308 = vcmp.lt.s32.totalorder %v289, 1
    %vm309 = vcmp.lt.s32.totalorder %v289, 2
    %vm310 = vcmp.lt.s32.totalorder %v289, 3
    %vm311 = vcmp.lt.s32.totalorder %v289, 4
    %v312 = vsel %vm308, %v292, %v295
    %v313 = vsel %vm311, %v301, 2102212464
    %v314 = vsel %vm310, %v298, %v313
    %v315 = vsel %vm309, %v312, %v314
    %v316 = vsel %vm308, %v295, %v298
    %v317 = vsel %vm311, %v304, 920167782
    %v318 = vsel %vm310, %v301, %v317
    %v319 = vsel %vm309, %v316, %v318
    %v320 = vsel %vm308, %v298, %v301
    %v321 = vsel %vm311, %v307, 1326507024
    %v322 = vsel %vm310, %v304, %v321
    %v323 = vsel %vm309, %v320, %v322
    %v324 = vshll.u32 %v284, 8
    %v325 = vmul.u32.u64.compose %v324, %v323
    %v326 = vextract.low.u32 %v325
    %v327 = vextract.high.u32 %v325
    %v328 = vmul.u32.u64.compose %v324, %v319
    %v329 = vextract.low.u32 %v328
    %v330 = vextract.high.u32 %v328
    %v331 = vmul.u32 %v324, %v315
    %v332 = vadd.s32 %v327, %v329
    %vm333 = vc.u32 %v327, %v329
    %v334 = vadd.s32 %v330, 1
    %v335 = vsel %vm333, %v334, %v330
    %v336 = vadd.s32 %v331, %v335
    %v337 = vadd.s32 %v336, 536870912
    %v338 = vshrl.u32 %v337, 30
    %v339 = vshll.u32 %v338, 30
    %v340 = vsub.s32 %v336, %v339
    %vm341 = vcmp.lt.s32.totalorder %v340, 0
    %v342 = vsub.s32 0, %v340
    %v343 = vsel %vm341, %v342, %v340
    %v344 = vclz %v343
    %v345 = vsub.s32 %v344, 2
    %vm346 = vcmp.gt.s32.totalorder 0, %v345
    %v347 = vsel %vm346, 0, %v345
    %v348 = vsub.s32 32, %v347
    %v349 = vshll.u32 %v340, %v347
    %v350 = vshrl.u32 %v332, %v348
    %v351 = vor.u32 %v349, %v350
    %v352 = vsub.s32 4294967266, %v347
    %v353 = vadd.s32 %v352, 127
    %v354 = vshll.u32 %v353, 23
    %v355 = vor.u32 4788187, %v354
    %v356 = vand.u32 2147483647, %v355
    %v358 = vcvt.s32.f32 %v351
    %v359 = vmul.f32 %v358, %v356
    %v360 = vxor.u32 %v359, 2147483648
    %v361 = vsel %vm278, %v360, %v359
    %v362 = vsub.s32 4, %v338
    %v363 = vsel %vm278, %v362, %v338
    %v364 = vsel %vm277, %v275, %v361
    %v365 = vsel %vm277, 0, %v363
    %v366 = vcosq.f32.pop %v364
    %v367 = vsinq.f32.pop %v364
    %vm368 = vweird.f32 %v275
    %v369 = vadd.s32 %v365, 3
    %v370 = vand.u32 %v369, 3
    %vm371 = vcmp.lt.s32.totalorder %v370, 2
    %vm372 = vcmp.eq.s32.totalorder %v370, 0
    %v373 = vxor.u32 %v367, 2147483648
    %v374 = vsel %vm372, %v366, %v373
    %vm375 = vcmp.eq.s32.totalorder %v370, 2
    %v376 = vxor.u32 %v366, 2147483648
    %v377 = vsel %vm375, %v376, %v367
    %v378 = vsel %vm371, %v374, %v377
    %v379 = vsel %vm368, nan, %v378
    %380 = vset.pattern.permute.xlu0 3
    %381 = vperm.xlu0 %380, %v38
    %v382 = vpop.permute.xlu0 %381
    %v384 = vmul.f32 %v382, %v49
    %v385 = vadd.f32 %v384, %v54
    %v386 = vand.u32 2147483647, %v385
    %vm387 = vcmp.le.f32.partialorder %v386, 0.7853982
    %vm388 = vcmp.lt.s32.totalorder %v385, 0
    %v389 = vand.u32 %v385, 2139095040
    %v390 = vshrl.u32 %v389, 23
    %v391 = vsub.s32 %v390, 127
    %v392 = vand.u32 2147483647, %v385
    %v393 = vand.u32 %v392, 8388607
    %v394 = vor.u32 %v393, 8388608
    %v395 = vsub.s32 0, %v394
    %v396 = vadd.s32 %v391, 1
    %vm397 = vcmp.gt.s32.totalorder %v396, 0
    %v398 = vsel %vm397, %v396, 0
    %v399 = vshrl.u32 %v398, 5
    %v400 = vand.u32 %v398, 31
    %v401 = vsub.s32 32, %v400
    %v402 = vshrl.u32 683565275, %v401
    %v403 = vshll.u32 683565275, %v400
    %v404 = vshrl.u32 2475754826, %v401
    %v405 = vor.u32 %v403, %v404
    %v406 = vshll.u32 2475754826, %v400
    %v407 = vshrl.u32 2131351028, %v401
    %v408 = vor.u32 %v406, %v407
    %v409 = vshll.u32 2131351028, %v400
    %v410 = vshrl.u32 2102212464, %v401
    %v411 = vor.u32 %v409, %v410
    %v412 = vshll.u32 2102212464, %v400
    %v413 = vshrl.u32 920167782, %v401
    %v414 = vor.u32 %v412, %v413
    %v415 = vshll.u32 920167782, %v400
    %v416 = vshrl.u32 1326507024, %v401
    %v417 = vor.u32 %v415, %v416
    %vm418 = vcmp.lt.s32.totalorder %v399, 1
    %vm419 = vcmp.lt.s32.totalorder %v399, 2
    %vm420 = vcmp.lt.s32.totalorder %v399, 3
    %vm421 = vcmp.lt.s32.totalorder %v399, 4
    %v422 = vsel %vm418, %v402, %v405
    %v423 = vsel %vm421, %v411, 2102212464
    %v424 = vsel %vm420, %v408, %v423
    %v425 = vsel %vm419, %v422, %v424
    %v426 = vsel %vm418, %v405, %v408
    %v427 = vsel %vm421, %v414, 920167782
    %v428 = vsel %vm420, %v411, %v427
    %v429 = vsel %vm419, %v426, %v428
    %v430 = vsel %vm418, %v408, %v411
    %v431 = vsel %vm421, %v417, 1326507024
    %v432 = vsel %vm420, %v414, %v431
    %v433 = vsel %vm419, %v430, %v432
    %v434 = vshll.u32 %v394, 8
    %v435 = vmul.u32.u64.compose %v434, %v433
    %v436 = vextract.low.u32 %v435
    %v437 = vextract.high.u32 %v435
    %v438 = vmul.u32.u64.compose %v434, %v429
    %v439 = vextract.low.u32 %v438
    %v440 = vextract.high.u32 %v438
    %v441 = vmul.u32 %v434, %v425
    %v442 = vadd.s32 %v437, %v439
    %vm443 = vc.u32 %v437, %v439
    %v444 = vadd.s32 %v440, 1
    %v445 = vsel %vm443, %v444, %v440
    %v446 = vadd.s32 %v441, %v445
    %v447 = vadd.s32 %v446, 536870912
    %v448 = vshrl.u32 %v447, 30
    %v449 = vshll.u32 %v448, 30
    %v450 = vsub.s32 %v446, %v449
    %vm451 = vcmp.lt.s32.totalorder %v450, 0
    %v452 = vsub.s32 0, %v450
    %v453 = vsel %vm451, %v452, %v450
    %v454 = vclz %v453
    %v455 = vsub.s32 %v454, 2
    %vm456 = vcmp.gt.s32.totalorder 0, %v455
    %v457 = vsel %vm456, 0, %v455
    %v458 = vsub.s32 32, %v457
    %v459 = vshll.u32 %v450, %v457
    %v460 = vshrl.u32 %v442, %v458
    %v461 = vor.u32 %v459, %v460
    %v462 = vsub.s32 4294967266, %v457
    %v463 = vadd.s32 %v462, 127
    %v464 = vshll.u32 %v463, 23
    %v465 = vor.u32 4788187, %v464
    %v466 = vand.u32 2147483647, %v465
    %v468 = vcvt.s32.f32 %v461
    %v469 = vmul.f32 %v468, %v466
    %v470 = vxor.u32 %v469, 2147483648
    %v471 = vsel %vm388, %v470, %v469
    %v472 = vsub.s32 4, %v448
    %v473 = vsel %vm388, %v472, %v448
    %v474 = vsel %vm387, %v385, %v471
    %v475 = vsel %vm387, 0, %v473
    %v476 = vcosq.f32.pop %v474
    %v477 = vsinq.f32.pop %v474
    %vm478 = vweird.f32 %v385
    %v479 = vadd.s32 %v475, 3
    %v480 = vand.u32 %v479, 3
    %vm481 = vcmp.lt.s32.totalorder %v480, 2
    %vm482 = vcmp.eq.s32.totalorder %v480, 0
    %v483 = vxor.u32 %v477, 2147483648
    %v484 = vsel %vm482, %v476, %v483
    %vm485 = vcmp.eq.s32.totalorder %v480, 2
    %v486 = vxor.u32 %v476, 2147483648
    %v487 = vsel %vm485, %v486, %v477
    %v488 = vsel %vm481, %v484, %v487
    %v489 = vsel %vm478, nan, %v488
    %491 = vrot.lane.b32.xlu0 %v269, 32
    %v492 = vpop.permute.xlu0 %491
    %495 = vrot.lane.b32.xlu0 %v379, 64
    %v496 = vpop.permute.xlu0 %495
    %499 = vrot.lane.b32.xlu0 %v489, 96
    %v500 = vpop.permute.xlu0 %499
    %vm502 = vcmask 261120
    %v503 = vsel %vm502, %v159, %v492
    %vm504 = vcmask 523264
    %v505 = vsel %vm504, %v503, %v496
    %vm506 = vcmask 785408
    %v507 = vsel %vm506, %v505, %v500
    %508 = vst [vmem:[#allocation7] sm:$0xff] %v507
    // Predicated region
    $region18: #{tpu_custom_call.1} parent=1 // pred_check
      _
    $region19: #{tpu_custom_call.1} parent=1 // pred_check_branch
      %510 = sbr.rel (0) target = $region21
    $region20: #{tpu_custom_call.1} parent=1 // pred_region
      %s512 = ssub.s32 128, 32
      %513 = vsyncadd [#allocation4], %s512
      %s514 = sshll.u32 [#allocation7], 4
      %s515 = int_to_ptr.vmem [resolvable:$true] %s514
      %520 = dma.vmem_to_hbm [thread:$0]  %s515, 32, %s2, [#allocation4], 32, 32, 2
    $region21: #{tpu_custom_call.1} parent=1 // pred_fallthru
      _
    // Predicated region
    $region22: #{tpu_custom_call.1} parent=1 // pred_check
      _
    $region23: #{tpu_custom_call.1} parent=1 // pred_check_branch
      %522 = sbr.rel (0) target = $region25
    $region24: #{tpu_custom_call.1} parent=1 // pred_region
      %523 = dma.done [#allocation4], 128
    $region25: #{tpu_custom_call.1} parent=1 // pred_fallthru
      _
    %524 = vsyncpa [#allocation3], 1
    %525 = vsyncpa [#allocation6], 1
    %526 = vsyncpa [#allocation4], 1

</llo_original>
